<compile_context>
chip_gen: v5e
topology: v5e:2x2
jax: 0.10.0
libtpu: 0.0.40
codegen_flags: <defaults>
</compile_context>

<pallas_src>
import math
import functools

import jax
import jax.numpy as jnp
from jax.experimental import pallas as pl
from jax.experimental.pallas import tpu as pltpu


def _exp_mod_kernel(t_ref, d_ref, x_ref, o_ref, scale_ref, *, shift):
    """One (TL, D) tile of  x * (exp(-t * |deltas|) + shift).

    t_ref:     (TL, 1)  time positions for this L tile
    d_ref:     (1, D)   per-channel decay rates
    x_ref:     (TL, D)  input tile (batch dim squeezed out of the block)
    o_ref:     (TL, D)  output tile
    scale_ref: (TL, D)  f32 VMEM scratch caching exp(-t*|deltas|)+shift across
                        the inner (batch, "arbitrary") grid axis.
    """
    # The modulation depends only on (L, D) -> compute once per L tile
    # (first batch step) and reuse it from VMEM for the other batch steps.
    @pl.when(pl.program_id(1) == 0)
    def _():
        t = t_ref[...].astype(jnp.float32)                 # (TL, 1)
        rate = jnp.abs(d_ref[...]).astype(jnp.float32)     # (1, D)
        scale = jnp.exp(-t * rate)                         # (TL, D) via broadcast
        if shift != 0.0:                                   # elide add when shift == 0
            scale = scale + shift
        scale_ref[...] = scale

    o_ref[...] = (x_ref[...].astype(jnp.float32) * scale_ref[...]).astype(o_ref.dtype)


# A (TL, 1) f32 block occupies TL * 512 bytes in VMEM (lane padding to 128).
_T_ROW_VMEM_BYTES = 512


def _row_vmem_bytes(D, elem):
    # 2 double-buffered x input tiles + 2 output tiles + f32 scale scratch
    # + 2 lane-padded t buffers, per row of TL.
    return 4 * D * elem + 4 * D + 2 * _T_ROW_VMEM_BYTES


def _pick_tile_l(L, D, elem):
    """Pick the L tile size: big enough to amortize per-step overhead, small
    enough to stay well inside scoped VMEM on every chip generation."""
    sublane = 16 if elem == 2 else 8
    vmem_budget = 20 * 1024 * 1024
    cap_rows = max(sublane, vmem_budget // _row_vmem_bytes(D, elem))
    # Target ~2 MiB per x tile (HBM-bound op; bigger tiles -> closer to roofline).
    target_rows = max(sublane, (2 * 1024 * 1024) // (D * elem))
    tl = min(L, cap_rows, target_rows)
    tl = max(sublane, (tl // sublane) * sublane)
    if tl >= L:
        return L
    # Prefer a tile that evenly divides L (no ragged last block); otherwise
    # accept a ragged last block (OOB rows are masked on writeback).
    for cand in range(tl, sublane - 1, -sublane):
        if L % cand == 0:
            return cand
    return tl


def exponential_modulation(t, deltas, x, shift=0.0):
    """t: (L, 1), deltas: (1, D), x: (B, L, D) -> x * (exp(-t * |deltas|) + shift)."""
    B, L, D = x.shape
    assert t.shape == (L, 1), t.shape
    assert deltas.shape == (1, D), deltas.shape

    elem = jnp.dtype(x.dtype).itemsize
    TL = _pick_tile_l(L, D, elem)
    num_l = pl.cdiv(L, TL)

    # Explicit VMEM budget (x in/out double buffers, decay scratch, t, deltas).
    vmem_needed = TL * _row_vmem_bytes(D, elem) + 2 * 8 * max(D, 128) * 4
    vmem_limit = int(min(32 * 1024 * 1024, max(vmem_needed + (2 << 20), 8 << 20)))

    kernel = functools.partial(_exp_mod_kernel, shift=float(shift))

    cost = pl.CostEstimate(
        flops=2 * B * L * D + 2 * L * D,                   # scale-mul (+shift) per element
        transcendentals=L * D,                             # exp computed once per (L, D)
        bytes_accessed=2 * B * L * D * elem + L * 4 + D * 4,
    )

    return pl.pallas_call(
        kernel,
        out_shape=jax.ShapeDtypeStruct((B, L, D), x.dtype),
        grid=(num_l, B),
        in_specs=[
            pl.BlockSpec((TL, 1), lambda l, b: (l, 0)),           # t: varies with L tile only
            pl.BlockSpec((1, D), lambda l, b: (0, 0)),            # deltas: shared
            pl.BlockSpec((None, TL, D), lambda l, b: (b, l, 0)),  # x: batch dim squeezed
        ],
        out_specs=pl.BlockSpec((None, TL, D), lambda l, b: (b, l, 0)),
        scratch_shapes=[pltpu.VMEM((TL, D), jnp.float32)],        # cached exp(-t|d|)+shift
        compiler_params=pltpu.CompilerParams(
            # L tiles are independent -> parallel (megacore sharding on v7x);
            # the batch axis carries the decay scratch -> arbitrary.
            dimension_semantics=("parallel", "arbitrary"),
            vmem_limit_bytes=vmem_limit,
        ),
        cost_estimate=cost,
    )(t, deltas, x)


def make_deltas(d_model, fast_decay_pct=0.3, slow_decay_pct=1.5, target=0.01):
    max_decay = math.log(target) / fast_decay_pct
    min_decay = math.log(target) / slow_decay_pct
    # matches torch.linspace(min_decay, max_decay, d_model)[None, None]
    return jnp.linspace(min_decay, max_decay, d_model, dtype=jnp.float32)[None, :]  # (1, D)


def _reference(t, deltas, x, shift):
    decay = jnp.exp(-t[None] * jnp.abs(deltas)[None])  # (1, L, D)
    return (x.astype(jnp.float32) * (decay + shift)).astype(x.dtype)


if __name__ == "__main__":
    key = jax.random.PRNGKey(0)
    k1, k2, k3 = jax.random.split(key, 3)

    # --- small shape consistent with the module (single L tile, shift == 0) ---
    B, L, D = 2, 8, 32
    shift = 0.0
    t = jnp.linspace(0.0, 1.0, L, endpoint=False, dtype=jnp.float32)[:, None]  # (L, 1)
    x = jax.random.normal(k1, (B, L, D), dtype=jnp.float32)
    deltas = make_deltas(D)  # (1, D)

    out = jax.block_until_ready(exponential_modulation(t, deltas, x, shift=shift))
    ref = _reference(t, deltas, x, shift)
    assert jnp.allclose(out, ref, atol=1e-5, rtol=1e-5), "mismatch vs reference (small f32)"

    # --- check exercising the tiled-L / batch-hoisted decay path, nonzero shift ---
    B2, L2, D2 = 2, 1024, 128
    shift2 = 0.25
    t2 = jnp.linspace(0.0, 1.0, L2, endpoint=False, dtype=jnp.float32)[:, None]
    x2 = jax.random.normal(k2, (B2, L2, D2), dtype=jnp.float32)
    deltas2 = make_deltas(D2)

    out2 = jax.block_until_ready(exponential_modulation(t2, deltas2, x2, shift=shift2))
    ref2 = _reference(t2, deltas2, x2, shift2)
    assert jnp.allclose(out2, ref2, atol=1e-5, rtol=1e-5), "mismatch vs reference (tiled f32)"

    # --- bf16 activations (halved HBM traffic path; compute stays f32) ---
    x3 = jax.random.normal(k3, (B2, L2, D2), dtype=jnp.float32).astype(jnp.bfloat16)
    out3 = jax.block_until_ready(exponential_modulation(t2, deltas2, x3, shift=shift2))
    ref3 = _reference(t2, deltas2, x3, shift2)
    assert jnp.allclose(out3.astype(jnp.float32), ref3.astype(jnp.float32),
                        atol=2e-2, rtol=2e-2), "mismatch vs reference (bf16)"

    print("KERNEL_OK")
</pallas_src>

<mosaic_0001>
module attributes {stable_mosaic.version = 11 : i64} {
  func.func @_exp_mod_kernel(%arg0: i32, %arg1: i32, %arg2: memref<8x1xf32, #tpu.memory_space<vmem>>, %arg3: memref<1x32xf32, #tpu.memory_space<vmem>>, %arg4: memref<1x8x32xf32, #tpu.memory_space<vmem>>, %arg5: memref<1x8x32xf32, #tpu.memory_space<vmem>>, %arg6: memref<8x32xf32, #tpu.memory_space<vmem>>) attributes {dimension_semantics = [#tpu.dimension_semantics<parallel>, #tpu.dimension_semantics<arbitrary>], iteration_bounds = array<i64: 1, 2>, scalar_prefetch = 0 : i64, scratch_operands = 1 : i64, tpu.core_type = #tpu.core_type<tc>, window_params = [{transform_indices = @transform_0, window_bounds = array<i64: 8, 1>}, {pipeline_mode = #tpu.pipeline_mode<synchronous>, transform_indices = @transform_1, window_bounds = array<i64: 1, 32>}, {transform_indices = @transform_2, window_bounds = array<i64: 1, 8, 32>}, {transform_indices = @transform_3, window_bounds = array<i64: 1, 8, 32>}]} {
    %c0_i32 = arith.constant 0 : i32
    %0 = arith.cmpi eq, %arg1, %c0_i32 : i32
    %1 = arith.extui %0 : i1 to i32
    %c0_i32_0 = arith.constant 0 : i32
    %2 = arith.cmpi ne, %1, %c0_i32_0 : i32
    scf.if %2 {
      %c0_8 = arith.constant 0 : index
      %c0_9 = arith.constant 0 : index
      %10 = vector.load %arg2[%c0_8, %c0_9] : memref<8x1xf32, #tpu.memory_space<vmem>>, vector<8x1xf32>
      %c0_10 = arith.constant 0 : index
      %c0_11 = arith.constant 0 : index
      %11 = vector.load %arg3[%c0_10, %c0_11] : memref<1x32xf32, #tpu.memory_space<vmem>>, vector<1x32xf32>
      %12 = math.absf %11 : vector<1x32xf32>
      %cst = arith.constant 0.000000e+00 : f32
      %13 = vector.broadcast %cst : f32 to vector<8x1xf32>
      %14 = arith.subf %13, %10 : vector<8x1xf32>
      %15 = vector.broadcast %14 : vector<8x1xf32> to vector<8x32xf32>
      %16 = vector.broadcast %12 : vector<1x32xf32> to vector<8x32xf32>
      %17 = arith.mulf %15, %16 : vector<8x32xf32>
      %18 = math.exp %17 : vector<8x32xf32>
      %c0_12 = arith.constant 0 : index
      %c0_13 = arith.constant 0 : index
      %19 = vector.load %arg6[%c0_12, %c0_13] : memref<8x32xf32, #tpu.memory_space<vmem>>, vector<8x32xf32>
      tpu.vector_store %arg6[%c0_12, %c0_13], %18 {strides = array<i32>} : memref<8x32xf32, #tpu.memory_space<vmem>>, vector<8x32xf32>,
    } else {
    }
    %c0 = arith.constant 0 : index
    %c0_1 = arith.constant 0 : index
    %c0_2 = arith.constant 0 : index
    %3 = vector.load %arg4[%c0, %c0_1, %c0_2] : memref<1x8x32xf32, #tpu.memory_space<vmem>>, vector<1x8x32xf32>
    %4 = vector.shape_cast %3 : vector<1x8x32xf32> to vector<8x32xf32>
    %c0_3 = arith.constant 0 : index
    %c0_4 = arith.constant 0 : index
    %5 = vector.load %arg6[%c0_3, %c0_4] : memref<8x32xf32, #tpu.memory_space<vmem>>, vector<8x32xf32>
    %6 = arith.mulf %4, %5 : vector<8x32xf32>
    %c0_5 = arith.constant 0 : index
    %c0_6 = arith.constant 0 : index
    %c0_7 = arith.constant 0 : index
    %7 = vector.load %arg5[%c0_5, %c0_6, %c0_7] : memref<1x8x32xf32, #tpu.memory_space<vmem>>, vector<1x8x32xf32>
    %8 = vector.shape_cast %7 : vector<1x8x32xf32> to vector<8x32xf32>
    %9 = vector.shape_cast %6 : vector<8x32xf32> to vector<1x8x32xf32>
    tpu.vector_store %arg5[%c0_5, %c0_6, %c0_7], %9 {strides = array<i32>} : memref<1x8x32xf32, #tpu.memory_space<vmem>>, vector<1x8x32xf32>,
    return
  }
  func.func @transform_0(%arg0: i32, %arg1: i32) -> (i32, i32) {
    %c0_i32 = arith.constant 0 : i32
    %c0_i32_0 = arith.constant 0 : i32
    return %arg0, %c0_i32 : i32, i32
  }
  func.func @transform_1(%arg0: i32, %arg1: i32) -> (i32, i32) {
    %c0_i32 = arith.constant 0 : i32
    %c0_i32_0 = arith.constant 0 : i32
    %c0_i32_1 = arith.constant 0 : i32
    return %c0_i32, %c0_i32_0 : i32, i32
  }
  func.func @transform_2(%arg0: i32, %arg1: i32) -> (i32, i32, i32) {
    %c0_i32 = arith.constant 0 : i32
    %c0_i32_0 = arith.constant 0 : i32
    return %arg1, %arg0, %c0_i32 : i32, i32, i32
  }
  func.func @transform_3(%arg0: i32, %arg1: i32) -> (i32, i32, i32) {
    %c0_i32 = arith.constant 0 : i32
    %c0_i32_0 = arith.constant 0 : i32
    return %arg1, %arg0, %c0_i32 : i32, i32, i32
  }
}

</mosaic_0001>

<llo_original>
// kernel: tpu_custom_call.1
$region0: #{tpu_custom_call.1}
  #allocation0 [shape = 'u32[]', space=smem, size = 0x4, offset = 0x4, fixed_abs, tag = 'smem constant byte address 0x4 - core index']
  #allocation1 [shape = 'u32[72,128]{1,0:T(1,128)}', space=vmem, size = 0x9000, scoped, tag = 'internal scratch']
  #allocation2 [shape = 'f32[8,32]{1,0:T(8,128)}', space=vmem, size = 0x1000, scoped, tag = 'scratch operand']
  %s0 = inlined_call_operand.vmem [shape: f32[8,1], index: 0, kind: input, shape index: {}]
  %s1 = inlined_call_operand.vmem [shape: f32[1,32], index: 1, kind: input, shape index: {}]
  %s2 = inlined_call_operand.hbm [shape: f32[2,8,32], index: 2, kind: input, shape index: {}]
  %s3 = inlined_call_operand.hbm [shape: f32[2,8,32], index: 3, kind: output, shape index: {}]
  %s4 = sld [smem:[#allocation0]]
  $region53: #{tpu_custom_call.1} parent=0
    _
  %s6 = ssub.s32 1, %s4
  %s7 = scalar_select 0, %s6, %s4
  $region1: #{tpu_custom_call.1} parent=0
    #allocation3 [shape = 'u8[8192]{0}', space=vmem, size = 0x2000, scoped, tag = 'input window, operand 2']
    #allocation4 [shape = 's32[2]{0}', space=sflag, size = 0x8, scoped, tag = 'scoped memory for tpu_custom_call.1']
    #allocation5 [shape = 's32[2]{0}', space=sflag, size = 0x8, scoped, tag = 'scoped memory for tpu_custom_call.1']
    #allocation6 [shape = 'u8[8192]{0}', space=vmem, size = 0x2000, scoped, tag = 'output window, operand 0']
    %8 = vsyncpa [#allocation4], 0
    %s9 = scalar_lea.sflag [#allocation4], 1
    %10 = vsyncpa %s9, 0
    %11 = vsyncpa [#allocation5], 0
    %s12 = scalar_lea.sflag [#allocation5], 1
    %13 = vsyncpa %s12, 0
    loop: start=0, step=1, limit=4
    $region2: #{tpu_custom_call.1} parent=1 // loop_pre_header
      _
    $region3: #{tpu_custom_call.1} parent=1 // loop_header
      %s15 = sphi 0, %s19
      %p16 = scmp.ge.s32.totalorder %s15, 4
      %s22 = sphi 0, %s34
      %s23 = sphi 0, %s30
      %s24 = sphi 0, %s22
      %s25 = sphi 0, %s23
      %s26 = sphi 0, %s24
      %s27 = sphi 0, %s25
      %s37 = sphi 0, %s39
      %s40 = sphi 0, %s37
      %s41 = sphi 0, %s40
      %s57 = sphi 0, %s41
      %s61 = sphi 0, %s61
      %s63 = sphi 0, %s61
      %s64 = sphi 0, %s63
      %s78 = sphi 0, %s64
      %s86 = sphi 0, %s88
      %s89 = sphi 0, %s86
      %s90 = sphi 0, %s89
      %s106 = sphi 0, %s90
      %s114 = sphi 0, %s116
      %s117 = sphi 0, %s114
      %s118 = sphi 0, %s117
      %s134 = sphi 0, %s118
    $region4: #{tpu_custom_call.1} parent=1 // loop_header_branch
      %18 = sbr.rel (%p16) target = $region8
    $region5: #{tpu_custom_call.1} parent=1 // loop_body
      %s20 = ssub.s32 %s15, 1
      %s21 = ssub.s32 %s15, 2
      %s28 = sadd.s32 1, %s23
      %p29 = scmp.ge.s32.totalorder %s28, 2
      %s30 = scalar_select %p29, 0, %s28
      %s31 = sadd.s32 1, %s22
      %s32 = scalar_select %p29, %s31, %s22
      %p33 = scmp.ge.s32.totalorder %s32, 1
      %s34 = scalar_select %p33, 0, %s32
      %s35 = ssub.s32 %s22, %s34
      %p36 = scmp.eq.s32.totalorder %s35, 0
      %s38 = sadd.s32 %s37, 1
      %s39 = scalar_select %p36, %s37, %s38
      %p42 = pneg %p36
      %p43 = scmp.eq.s32.totalorder %s15, 1
      %p44 = por %p42, %p43
      %p45 = scmp.ne.s32.totalorder %s37, %s40
      %p46 = scmp.eq.s32.totalorder %s15, 0
      %p47 = por %p45, %p46
      %p48 = scmp.ne.s32.totalorder %s37, %s40
      %p49 = scmp.eq.s32.totalorder %s20, 1
      %p50 = por %p48, %p49
      %p51 = scmp.ne.s32.totalorder %s40, %s41
      %p52 = scmp.eq.s32.totalorder %s20, 0
      %p53 = por %p51, %p52
      %p54 = scmp.ne.s32.totalorder %s40, %s41
      %p55 = scmp.eq.s32.totalorder %s21, 1
      %p56 = por %p54, %p55
      %p58 = scmp.ne.s32.totalorder %s41, %s57
      %p59 = scmp.eq.s32.totalorder %s21, 0
      %p60 = por %p58, %p59
      %s62 = sadd.s32 %s61, 1
      %p65 = scmp.eq.s32.totalorder %s15, 1
      %p66 = scmp.ne.s32.totalorder %s61, %s63
      %p67 = scmp.eq.s32.totalorder %s15, 0
      %p68 = por %p66, %p67
      %p69 = scmp.ne.s32.totalorder %s61, %s63
      %p70 = scmp.eq.s32.totalorder %s20, 1
      %p71 = por %p69, %p70
      %p72 = scmp.ne.s32.totalorder %s63, %s64
      %p73 = scmp.eq.s32.totalorder %s20, 0
      %p74 = por %p72, %p73
      %p75 = scmp.ne.s32.totalorder %s63, %s64
      %p76 = scmp.eq.s32.totalorder %s21, 1
      %p77 = por %p75, %p76
      %p79 = scmp.ne.s32.totalorder %s64, %s78
      %p80 = scmp.eq.s32.totalorder %s21, 0
      %p81 = por %p79, %p80
      %s82 = ssub.s32 %s23, %s30
      %s83 = ssub.s32 %s22, %s34
      %s84 = sor.u32 %s82, %s83
      %p85 = scmp.eq.s32.totalorder %s84, 0
      %s87 = sadd.s32 %s86, 1
      %s88 = scalar_select %p85, %s86, %s87
      %p91 = pneg %p85
      %p92 = scmp.eq.s32.totalorder %s15, 1
      %p93 = por %p91, %p92
      %p94 = scmp.ne.s32.totalorder %s86, %s89
      %p95 = scmp.eq.s32.totalorder %s15, 0
      %p96 = por %p94, %p95
      %p97 = scmp.ne.s32.totalorder %s86, %s89
      %p98 = scmp.eq.s32.totalorder %s20, 1
      %p99 = por %p97, %p98
      %p100 = scmp.ne.s32.totalorder %s89, %s90
      %p101 = scmp.eq.s32.totalorder %s20, 0
      %p102 = por %p100, %p101
      %p103 = scmp.ne.s32.totalorder %s89, %s90
      %p104 = scmp.eq.s32.totalorder %s21, 1
      %p105 = por %p103, %p104
      %p107 = scmp.ne.s32.totalorder %s90, %s106
      %p108 = scmp.eq.s32.totalorder %s21, 0
      %p109 = por %p107, %p108
      %s110 = ssub.s32 %s23, %s30
      %s111 = ssub.s32 %s22, %s34
      %s112 = sor.u32 %s110, %s111
      %p113 = scmp.eq.s32.totalorder %s112, 0
      %s115 = sadd.s32 %s114, 1
      %s116 = scalar_select %p113, %s114, %s115
      %p119 = pneg %p113
      %p120 = scmp.eq.s32.totalorder %s15, 1
      %p121 = por %p119, %p120
      %p122 = scmp.ne.s32.totalorder %s114, %s117
      %p123 = scmp.eq.s32.totalorder %s15, 0
      %p124 = por %p122, %p123
      %p125 = scmp.ne.s32.totalorder %s114, %s117
      %p126 = scmp.eq.s32.totalorder %s20, 1
      %p127 = por %p125, %p126
      %p128 = scmp.ne.s32.totalorder %s117, %s118
      %p129 = scmp.eq.s32.totalorder %s20, 0
      %p130 = por %p128, %p129
      %p131 = scmp.ne.s32.totalorder %s117, %s118
      %p132 = scmp.eq.s32.totalorder %s21, 1
      %p133 = por %p131, %p132
      %p135 = scmp.ne.s32.totalorder %s118, %s134
      %p136 = scmp.eq.s32.totalorder %s21, 0
      %p137 = por %p135, %p136
      %p138 = scmp.le.s32.totalorder 1, %s15
      %p139 = scmp.lt.s32.totalorder %s15, 3
      %p140 = pnand %p138, %p139
      %p141 = pneg %p140
      // Predicated region
      $region9: #{tpu_custom_call.1} parent=5 // pred_check
        _
      $region10: #{tpu_custom_call.1} parent=5 // pred_check_branch
        %143 = sbr.rel (%p140) target = $region12
      $region11: #{tpu_custom_call.1} parent=5 // pred_region
        %s144 = ssub.s32 %s15, 1
        // Predicated region
        $region13: #{tpu_custom_call.1} parent=11 // pred_check
          %p145 = pneg %p53
        $region14: #{tpu_custom_call.1} parent=11 // pred_check_branch
          %147 = sbr.rel (%p145) target = $region16
        $region15: #{tpu_custom_call.1} parent=11 // pred_region
          %p148 = scmp.lt.s32.totalorder %s24, 0
          %s149 = scalar_select %p148, %s24, 0
          %s150 = smul.addr %s149, 8
          %s151 = scalar_lea.vmem %s0, %s150
        $region16: #{tpu_custom_call.1} parent=11 // pred_fallthru
          _
        // Predicated region
        $region17: #{tpu_custom_call.1} parent=11 // pred_check
          %p152 = pneg %p74
        $region18: #{tpu_custom_call.1} parent=11 // pred_check_branch
          %154 = sbr.rel (%p152) target = $region20
        $region19: #{tpu_custom_call.1} parent=11 // pred_region
          _
        $region20: #{tpu_custom_call.1} parent=11 // pred_fallthru
          _
      $region12: #{tpu_custom_call.1} parent=5 // pred_fallthru
        _
      %p155 = scmp.lt.s32.totalorder %s15, 2
      // Predicated region
      $region21: #{tpu_custom_call.1} parent=5 // pred_check
        %p156 = pneg %p155
      $region22: #{tpu_custom_call.1} parent=5 // pred_check_branch
        %158 = sbr.rel (%p156) target = $region24
      $region23: #{tpu_custom_call.1} parent=5 // pred_region
        // Predicated region
        $region25: #{tpu_custom_call.1} parent=23 // pred_check
          %p159 = pneg %p96
        $region26: #{tpu_custom_call.1} parent=23 // pred_check_branch
          %161 = sbr.rel (%p159) target = $region28
        $region27: #{tpu_custom_call.1} parent=23 // pred_region
          %s162 = sand.u32 %s86, 1
          %s163 = scalar_lea.sflag [#allocation4], %s162
          %s164 = sand.u32 %s86, 1
          %s165 = smul.addr %s164, 8
          %s166 = scalar_lea.vmem [#allocation3], %s165
          %168 = vsyncadd %s163, 0
          %s169 = sadd.s32 %s22, %s23
          %s170 = smul.addr %s169, 8
          %s171 = scalar_lea.hbm %s2, %s170
          %s173 = sshll.u32 %s171, 4
          %s174 = int_to_ptr.hbm [resolvable:$true] %s173
          %s175 = sshll.u32 %s166, 4
          %s176 = int_to_ptr.vmem [resolvable:$true] %s175
          %178 = dma.hbm_to_vmem [thread:$0]  %s174, 128, %s176, %s163
        $region28: #{tpu_custom_call.1} parent=23 // pred_fallthru
          _
      $region24: #{tpu_custom_call.1} parent=5 // pred_fallthru
        _
      %p179 = scmp.le.s32.totalorder 1, %s15
      %p180 = scmp.lt.s32.totalorder %s15, 3
      %p181 = pnand %p179, %p180
      %p182 = pneg %p181
      // Predicated region
      $region29: #{tpu_custom_call.1} parent=5 // pred_check
        _
      $region30: #{tpu_custom_call.1} parent=5 // pred_check_branch
        %184 = sbr.rel (%p181) target = $region32
      $region31: #{tpu_custom_call.1} parent=5 // pred_region
        %s185 = ssub.s32 %s15, 1
        %s186 = sand.u32 %s89, 1
        %s187 = scalar_lea.sflag [#allocation4], %s186
        %s188 = sand.u32 %s89, 1
        %s189 = smul.addr %s188, 8
        %s190 = scalar_lea.vmem [#allocation3], %s189
        // Predicated region
        $region33: #{tpu_custom_call.1} parent=31 // pred_check
          %p191 = pneg %p102
        $region34: #{tpu_custom_call.1} parent=31 // pred_check_branch
          %193 = sbr.rel (%p191) target = $region36
        $region35: #{tpu_custom_call.1} parent=31 // pred_region
          %195 = dma.done %s187, 128
        $region36: #{tpu_custom_call.1} parent=31 // pred_fallthru
          _
        %p196 = scmp.lt.s32.totalorder %s24, 0
        %s197 = scalar_select %p196, %s24, 0
        %s198 = smul.addr %s197, 8
        %s199 = scalar_lea.vmem %s0, %s198
        %p200 = pneg %p53
        %p201 = pneg %p50
        %p202 = pneg %p74
        %p203 = pneg %p71
        %s204 = sand.u32 %s89, 1
        %s205 = scalar_lea.sflag [#allocation4], %s204
        %s206 = sand.u32 %s89, 1
        %s207 = smul.addr %s206, 8
        %s208 = scalar_lea.vmem [#allocation3], %s207
        %p209 = pneg %p102
        %p210 = pneg %p99
        %p211 = pneg %p130
        %p212 = pneg %p127
        %s213 = sand.u32 %s117, 1
        %s214 = scalar_lea.sflag [#allocation5], %s213
        %s215 = sand.u32 %s117, 1
        %s216 = smul.addr %s215, 8
        %s217 = scalar_lea.vmem [#allocation6], %s216
        %p218 = scmp.lt.s32.totalorder %s24, 0
        %s219 = scalar_select %p218, %s24, 0
        %s220 = smul.addr %s219, 8
        %s221 = scalar_lea.vmem %s0, %s220
        %p222 = scmp.eq.s32.totalorder %s25, 0
        // Predicated region
        $region37: #{tpu_custom_call.1} parent=31 // pred_check
          %p223 = pneg %p222
        $region38: #{tpu_custom_call.1} parent=31 // pred_check_branch
          %225 = sbr.rel (%p223) target = $region40
        $region39: #{tpu_custom_call.1} parent=31 // pred_region
          %v226 = vld [vmem:[%s221] sm:$0xff]
          %v227 = vld [vmem:[%s1] sm:$0x1]
          %v228 = vand.u32 2147483647, %v227
          %v229 = vsub.f32 0.0, %v226
          %231 = vset.pattern.permute.xlu0 0
          %232 = vperm.xlu0 %231, %v229
          %v233 = vpop.permute.xlu0 %232
          %v236 = vperm.slane %v228, 0
          %v238 = vmul.f32 %v233, %v236
          %v239 = vmul.f32 %v238, 1.442695
          %v240 = vpow.pop %v239
          %vm241 = vcmask 261120
          %242 = vst.msk [vmem:[#allocation2] sm:$0xff] %vm241, %v240
        $region40: #{tpu_custom_call.1} parent=31 // pred_fallthru
          _
        %v243 = vld [vmem:[%s190] sm:$0xff]
        %v244 = vld [vmem:[#allocation2] sm:$0xff]
        %v245 = vmul.f32 %v243, %v244
        %vm246 = vcmask 261120
        %247 = vst.msk [vmem:[%s217] sm:$0xff] %vm246, %v245
        %s248 = sand.u32 %s117, 1
        %s249 = scalar_lea.sflag [#allocation5], %s248
        %s250 = sand.u32 %s117, 1
        %s251 = smul.addr %s250, 8
        %s252 = scalar_lea.vmem [#allocation6], %s251
        // Predicated region
        $region41: #{tpu_custom_call.1} parent=31 // pred_check
          %p253 = pneg %p127
        $region42: #{tpu_custom_call.1} parent=31 // pred_check_branch
          %255 = sbr.rel (%p253) target = $region44
        $region43: #{tpu_custom_call.1} parent=31 // pred_region
          %257 = vsyncadd %s249, 0
          %s258 = sadd.s32 %s24, %s25
          %s259 = smul.addr %s258, 8
          %s260 = scalar_lea.hbm %s3, %s259
          %s262 = sshll.u32 %s252, 4
          %s263 = int_to_ptr.vmem [resolvable:$true] %s262
          %s264 = sshll.u32 %s260, 4
          %s265 = int_to_ptr.hbm [resolvable:$true] %s264
          %267 = dma.vmem_to_hbm [thread:$0]  %s263, 128, %s265, %s249
        $region44: #{tpu_custom_call.1} parent=31 // pred_fallthru
          _
      $region32: #{tpu_custom_call.1} parent=5 // pred_fallthru
        _
      %p268 = scmp.le.s32.totalorder 2, %s15
      // Predicated region
      $region45: #{tpu_custom_call.1} parent=5 // pred_check
        %p269 = pneg %p268
      $region46: #{tpu_custom_call.1} parent=5 // pred_check_branch
        %271 = sbr.rel (%p269) target = $region48
      $region47: #{tpu_custom_call.1} parent=5 // pred_region
        %s272 = ssub.s32 %s15, 2
        // Predicated region
        $region49: #{tpu_custom_call.1} parent=47 // pred_check
          %p273 = pneg %p133
        $region50: #{tpu_custom_call.1} parent=47 // pred_check_branch
          %275 = sbr.rel (%p273) target = $region52
        $region51: #{tpu_custom_call.1} parent=47 // pred_region
          %s276 = sand.u32 %s118, 1
          %s277 = scalar_lea.sflag [#allocation5], %s276
          %s278 = sand.u32 %s118, 1
          %s279 = smul.addr %s278, 8
          %s280 = scalar_lea.vmem [#allocation6], %s279
          %282 = dma.done %s277, 128
        $region52: #{tpu_custom_call.1} parent=47 // pred_fallthru
          _
      $region48: #{tpu_custom_call.1} parent=5 // pred_fallthru
        _
    $region6: #{tpu_custom_call.1} parent=1 // loop_footer
      %s19 = sadd.s32 1, %s15
    $region7: #{tpu_custom_call.1} parent=1 // loop_footer_branch
      %14 = sbr.rel target = $region3
    $region8: #{tpu_custom_call.1} parent=1 // loop_exit
      _
    %283 = vsyncpa [#allocation4], 1
    %s284 = scalar_lea.sflag [#allocation4], 1
    %285 = vsyncpa %s284, 1
    %286 = vsyncpa [#allocation5], 1
    %s287 = scalar_lea.sflag [#allocation5], 1
    %288 = vsyncpa %s287, 1

</llo_original>
